<compile_context>
chip_gen: v6e
topology: v6e:2x2x1
jax: 0.10.0
libtpu: 0.0.40
codegen_flags: <defaults>
</compile_context>

<pallas_src>
import functools

import numpy as np
import jax
import jax.numpy as jnp
from jax import lax
from jax.experimental import pallas as pl
from jax.experimental.pallas import tpu as pltpu


def _tpu_generation():
    """Best-effort chip-generation sniff for tiling / dtype decisions."""
    try:
        kind = jax.devices()[0].device_kind.lower()
    except Exception:
        return "unknown"
    if "v5" in kind:
        return "v5"
    if "v6" in kind:
        return "v6"
    if "v7" in kind or "7x" in kind:
        return "v7"
    return "unknown"


# ---------------------------------------------------------------------------
# Vision branch: per-batch, chunked over key positions.
# The kernel consumes x^T per batch element, i.e. xt = (C, R) (channel-major,
# which for vision is exactly the pre-permute reshape output), and produces
# out = x @ softmax(k^T q / sqrt(d)) of shape (R, C).
# Grid = (B, C // chunk); batch axis "parallel", key-position chunks "arbitrary".
# ---------------------------------------------------------------------------
def _index_chunked_kernel(xt_ref, w1t_ref, b1_ref, s1_ref, t1_ref,
                          w2t_ref, b2_ref, wk_ref, bk_ref,
                          out_ref, q_ref, *, chunk, exp_bf16):
    c = pl.program_id(1)

    @pl.when(c == 0)
    def _():
        # query MLP on x = xt^T: Linear(C->H) -> BN(eval, channel = rows) -> ReLU
        #                        -> Linear(H->C); 1/sqrt(d) pre-folded into w2t/b2.
        xt = xt_ref[...].astype(jnp.bfloat16)                         # (C, R)
        h = lax.dot_general(xt, w1t_ref[...], (((0,), (0,)), ((), ())),
                            preferred_element_type=jnp.float32)       # (R, H)
        h = jnp.maximum((h + b1_ref[...]) * s1_ref[...] + t1_ref[...], 0.0)
        q = jnp.dot(h.astype(jnp.bfloat16), w2t_ref[...],
                    preferred_element_type=jnp.float32) + b2_ref[...]
        q_ref[...] = q.astype(jnp.bfloat16)                           # (R, C)

    start = pl.multiple_of(c * chunk, chunk)
    xt_c = xt_ref[pl.ds(start, chunk), :]                             # (TC, R) f32
    xt_cb = xt_c.astype(jnp.bfloat16)

    # keys for this chunk (conv1x1 with eval-BN folded into wk/bk, then ReLU),
    # key-position major -> the score matmul below needs no transpose.
    kt_c = lax.dot_general(xt_cb, wk_ref[...], (((1,), (1,)), ((), ())),
                           preferred_element_type=jnp.float32) + bk_ref[...]
    kt_c = jnp.maximum(kt_c, 0.0).astype(jnp.bfloat16)                # (TC, R)

    # score rows for these key positions (softmax rows are complete: full C cols)
    s = jnp.dot(kt_c, q_ref[...], preferred_element_type=jnp.float32)  # (TC, C)
    sm = s - jnp.max(s, axis=-1, keepdims=True)
    if exp_bf16:
        p = jnp.exp(sm.astype(jnp.bfloat16))        # bf16 EUP path (v6e / v7x)
    else:
        p = jnp.exp(sm)                             # f32 path (v5e)
    denom = jnp.sum(p.astype(jnp.float32), axis=-1, keepdims=True)
    inv = pl.reciprocal(denom, approx=True)                           # (TC, 1)
    if not exp_bf16:
        p = p.astype(jnp.bfloat16)
    # fold the softmax reciprocal into the tiny (TC, R) operand, not the (TC, C) exp
    xt_s = (xt_c * inv).astype(jnp.bfloat16)                          # (TC, R)

    # out += x[:, chunk] @ softmax_chunk  ==  xt_s^T @ p  (contract key positions)
    contrib = lax.dot_general(xt_s, p, (((0,), (0,)), ((), ())),
                              preferred_element_type=jnp.float32)     # (R, C)

    @pl.when(c == 0)
    def _():
        out_ref[...] = contrib

    @pl.when(c != 0)
    def _():
        out_ref[...] += contrib


def vision_branch(xt, params, *, d_model, chunk=None, vmem_limit_bytes=None,
                  exp_bf16=None):
    """xt: (B, C, R) float32 (channel-major layout). Returns (B, R, C)."""
    B, C, R = xt.shape
    gen = _tpu_generation()
    if chunk is None:
        # 128 MiB VMEM parts (v5e/v6e) take chunk=1024; keep 512 on v7x (64 MiB).
        chunk = 1024 if gen in ("v5", "v6") else 512
    if vmem_limit_bytes is None:
        vmem_limit_bytes = (80 << 20) if gen in ("v5", "v6") else (40 << 20)
    if exp_bf16 is None:
        exp_bf16 = gen != "v5"      # v5e EUP/VPU has no bf16 support
    assert C % chunk == 0 and chunk % 128 == 0

    w1t, b1, s1, t1, w2t, b2, wk, bk = params
    H = w1t.shape[1]
    inv_sqrt_d = float(1.0 / np.sqrt(d_model))

    # bf16 MXU weights; 1/sqrt(d) folded into the second Linear (weight + bias).
    w1t_b = w1t.astype(jnp.bfloat16)
    w2t_b = (w2t * inv_sqrt_d).astype(jnp.bfloat16)
    b2_s = (b2 * inv_sqrt_d).reshape(1, C).astype(jnp.float32)
    wk_b = wk.astype(jnp.bfloat16)

    kernel = functools.partial(_index_chunked_kernel, chunk=chunk,
                               exp_bf16=bool(exp_bf16))

    def const_spec(shape):
        nd = len(shape)
        return pl.BlockSpec(shape, lambda b, c, _nd=nd: (0,) * _nd)

    return pl.pallas_call(
        kernel,
        out_shape=jax.ShapeDtypeStruct((B, R, C), jnp.float32),
        grid_spec=pltpu.PrefetchScalarGridSpec(
            num_scalar_prefetch=0,
            grid=(B, C // chunk),
            in_specs=[
                pl.BlockSpec((None, C, R), lambda b, c: (b, 0, 0)),  # x^T, one batch
                const_spec((C, H)),   # w1t  (Linear C->H, pre-transposed, bf16)
                const_spec((1, H)),   # b1
                const_spec((R, 1)),   # s1   (BN scale, per row)
                const_spec((R, 1)),   # t1   (BN shift, per row)
                const_spec((H, C)),   # w2t  (Linear H->C, bf16, * 1/sqrt(d))
                const_spec((1, C)),   # b2   (* 1/sqrt(d))
                const_spec((R, R)),   # wk   (conv1x1 weight with BN folded, bf16)
                const_spec((1, R)),   # bk   (row layout for key-major chunks)
            ],
            out_specs=pl.BlockSpec((None, R, C), lambda b, c: (b, 0, 0)),
            scratch_shapes=[
                pltpu.VMEM((R, C), jnp.bfloat16),   # query, pre-scaled by 1/sqrt(d)
            ],
        ),
        compiler_params=pltpu.CompilerParams(
            dimension_semantics=("parallel", "arbitrary"),
            vmem_limit_bytes=vmem_limit_bytes),
    )(xt, w1t_b, b1.reshape(1, H), s1.reshape(R, 1), t1.reshape(R, 1),
      w2t_b, b2_s, wk_b, bk.reshape(1, R))


# ---------------------------------------------------------------------------
# Audio branch: tiny per-element (R=64, C=128) -> one batch element per grid step,
# batch axis "parallel" (pipelined DMA; shards across v7x TensorCores).
# ---------------------------------------------------------------------------
def _index_audio_kernel(x_ref, w1t_ref, b1_ref, s1_ref, t1_ref,
                        w2t_ref, b2_ref, wk_ref, bk_ref, out_ref):
    x = x_ref[...]                                                    # (R, C) f32
    xb = x.astype(jnp.bfloat16)
    h = jnp.dot(xb, w1t_ref[...], preferred_element_type=jnp.float32)
    h = jnp.maximum((h + b1_ref[...]) * s1_ref[...] + t1_ref[...], 0.0)
    q = jnp.dot(h.astype(jnp.bfloat16), w2t_ref[...],
                preferred_element_type=jnp.float32) + b2_ref[...]
    qb = q.astype(jnp.bfloat16)                                       # (R, C)
    k = jnp.dot(wk_ref[...], xb, preferred_element_type=jnp.float32) + bk_ref[...]
    kb = jnp.maximum(k, 0.0).astype(jnp.bfloat16)                     # (R, C)
    s = lax.dot_general(kb, qb, (((0,), (0,)), ((), ())),
                        preferred_element_type=jnp.float32)           # (C, C)
    e = jnp.exp(s - jnp.max(s, axis=-1, keepdims=True))
    inv = pl.reciprocal(jnp.sum(e, axis=-1, keepdims=True), approx=True)
    p = (e * inv).astype(jnp.bfloat16)
    out_ref[...] = jnp.dot(xb, p, preferred_element_type=jnp.float32)


def audio_branch(x, params, *, d_model):
    """x: (B, R, C) float32 (Conv1d NCL layout). Returns (B, R, C)."""
    B, R, C = x.shape
    w1t, b1, s1, t1, w2t, b2, wk, bk = params
    H = w1t.shape[1]
    inv_sqrt_d = float(1.0 / np.sqrt(d_model))
    w1t_b = w1t.astype(jnp.bfloat16)
    w2t_b = (w2t * inv_sqrt_d).astype(jnp.bfloat16)
    b2_s = (b2 * inv_sqrt_d).reshape(1, C).astype(jnp.float32)
    wk_b = wk.astype(jnp.bfloat16)

    def const_spec(shape):
        nd = len(shape)
        return pl.BlockSpec(shape, lambda b, _nd=nd: (0,) * _nd)

    return pl.pallas_call(
        _index_audio_kernel,
        out_shape=jax.ShapeDtypeStruct((B, R, C), jnp.float32),
        grid_spec=pltpu.PrefetchScalarGridSpec(
            num_scalar_prefetch=0,
            grid=(B,),
            in_specs=[
                pl.BlockSpec((None, R, C), lambda b: (b, 0, 0)),
                const_spec((C, H)),    # w1t (bf16)
                const_spec((1, H)),    # b1
                const_spec((R, 1)),    # s1
                const_spec((R, 1)),    # t1
                const_spec((H, C)),    # w2t (bf16, * 1/sqrt(d))
                const_spec((1, C)),    # b2  (* 1/sqrt(d))
                const_spec((R, R)),    # wk  (bf16)
                const_spec((R, 1)),    # bk
            ],
            out_specs=pl.BlockSpec((None, R, C), lambda b: (b, 0, 0)),
        ),
        compiler_params=pltpu.CompilerParams(
            dimension_semantics=("parallel",)),
    )(x, w1t_b, b1.reshape(1, H), s1.reshape(R, 1), t1.reshape(R, 1),
      w2t_b, b2_s, wk_b, bk.reshape(R, 1))


# ---------------------------------------------------------------------------
# Parameters / reference
# ---------------------------------------------------------------------------
def make_params(key, R, C):
    """Deterministic synthetic parameters for one branch (hidden dim H == R)."""
    H = R
    ks = jax.random.split(key, 10)

    def u(k, shape, fan_in):
        b = 1.0 / np.sqrt(fan_in)
        return jax.random.uniform(k, shape, jnp.float32, -b, b)

    w1 = u(ks[0], (H, C), C)   # Linear(C->H).weight
    b1 = u(ks[1], (H,), C)
    w2 = u(ks[2], (C, H), H)   # Linear(H->C).weight
    b2 = u(ks[3], (C,), H)
    wc = u(ks[4], (R, R), R)   # Conv1d(R->R, ks=1).weight squeezed
    bc = u(ks[5], (R,), R)

    # BatchNorm1d(R), eval mode: running_mean=0, running_var=1, gamma/beta synthetic.
    # (For real checkpoints: s = gamma/sqrt(var+eps), t = beta - mean*s.)
    eps = 1e-5
    g1 = 1.0 + 0.1 * jax.random.normal(ks[6], (R,), jnp.float32)
    be1 = 0.1 * jax.random.normal(ks[7], (R,), jnp.float32)
    gk = 1.0 + 0.1 * jax.random.normal(ks[8], (R,), jnp.float32)
    bek = 0.1 * jax.random.normal(ks[9], (R,), jnp.float32)

    s1 = g1 / np.sqrt(1.0 + eps)
    t1 = be1
    sk = gk / np.sqrt(1.0 + eps)
    wk = sk[:, None] * wc                      # fold BN into conv weight
    bk = sk * bc + bek

    return (w1.T, b1, s1, t1, w2.T, b2, wk, bk)


def ref_branch(x, params, d_model):
    """Pure-JAX reference for one branch (matches the PyTorch math). x: (B, R, C)."""
    w1t, b1, s1, t1, w2t, b2, wk, bk = params
    h = jnp.einsum('brc,ch->brh', x, w1t) + b1
    h = jnp.maximum(h * s1[:, None] + t1[:, None], 0.0)
    q = jnp.einsum('brh,hc->brc', h, w2t) + b2
    k = jnp.maximum(jnp.einsum('or,brc->boc', wk, x) + bk[:, None], 0.0)
    s = jnp.einsum('brc,brd->bcd', k, q) / np.sqrt(d_model)
    p = jax.nn.softmax(s, axis=-1)
    return jnp.einsum('brc,bcd->brd', x, p)


if __name__ == "__main__":
    B = 2   # >= 2 keeps both v7x TensorCores busy on the "parallel" batch axis
    key = jax.random.PRNGKey(0)
    k_v, k_a, k_pv, k_pa = jax.random.split(key, 4)

    # Raw module inputs: Visionfeatures (NCHW, reshaped inside forward), Audiofeatures (NCL).
    vision_in = jax.random.normal(k_v, (B, 2048, 7, 7), jnp.float32)
    audio_in = jax.random.normal(k_a, (B, 64, 128), jnp.float32)

    params_a = make_params(k_pa, R=64, C=128)
    params_v = make_params(k_pv, R=49, C=2048)

    # forward() glue: reshape(B, 2048, 49); the permute(0, 2, 1) is absorbed by the
    # vision kernel (it consumes the channel-major layout and emits (B, 49, 2048)).
    vision_xt = vision_in.reshape(B, 2048, 49)

    audio_out = audio_branch(audio_in, params_a, d_model=128)
    vision_out = vision_branch(vision_xt, params_v, d_model=2048)
    jax.block_until_ready((vision_out, audio_out))

    vfeat = jnp.transpose(vision_xt, (0, 2, 1))          # (B, 49, 2048) for reference
    ref_a = ref_branch(audio_in, params_a, 128)
    ref_v = ref_branch(vfeat, params_v, 2048)
    np.testing.assert_allclose(np.asarray(audio_out), np.asarray(ref_a),
                               rtol=2e-2, atol=2e-2)
    np.testing.assert_allclose(np.asarray(vision_out), np.asarray(ref_v),
                               rtol=2e-2, atol=2e-2)

    print("KERNEL_OK")
</pallas_src>

<mosaic_0001>
module attributes {stable_mosaic.version = 11 : i64} {
  func.func @_index_audio_kernel(%arg0: i32, %arg1: memref<1x64x128xf32, #tpu.memory_space<vmem>>, %arg2: memref<128x64xbf16, #tpu.memory_space<vmem>>, %arg3: memref<1x64xf32, #tpu.memory_space<vmem>>, %arg4: memref<64x1xf32, #tpu.memory_space<vmem>>, %arg5: memref<64x1xf32, #tpu.memory_space<vmem>>, %arg6: memref<64x128xbf16, #tpu.memory_space<vmem>>, %arg7: memref<1x128xf32, #tpu.memory_space<vmem>>, %arg8: memref<64x64xbf16, #tpu.memory_space<vmem>>, %arg9: memref<64x1xf32, #tpu.memory_space<vmem>>, %arg10: memref<1x64x128xf32, #tpu.memory_space<vmem>>) attributes {dimension_semantics = [#tpu.dimension_semantics<parallel>], iteration_bounds = array<i64: 2>, scalar_prefetch = 0 : i64, scratch_operands = 0 : i64, tpu.core_type = #tpu.core_type<tc>, window_params = [{transform_indices = @transform_0, window_bounds = array<i64: 1, 64, 128>}, {pipeline_mode = #tpu.pipeline_mode<synchronous>, transform_indices = @transform_1, window_bounds = array<i64: 128, 64>}, {pipeline_mode = #tpu.pipeline_mode<synchronous>, transform_indices = @transform_2, window_bounds = array<i64: 1, 64>}, {pipeline_mode = #tpu.pipeline_mode<synchronous>, transform_indices = @transform_3, window_bounds = array<i64: 64, 1>}, {pipeline_mode = #tpu.pipeline_mode<synchronous>, transform_indices = @transform_4, window_bounds = array<i64: 64, 1>}, {pipeline_mode = #tpu.pipeline_mode<synchronous>, transform_indices = @transform_5, window_bounds = array<i64: 64, 128>}, {pipeline_mode = #tpu.pipeline_mode<synchronous>, transform_indices = @transform_6, window_bounds = array<i64: 1, 128>}, {pipeline_mode = #tpu.pipeline_mode<synchronous>, transform_indices = @transform_7, window_bounds = array<i64: 64, 64>}, {pipeline_mode = #tpu.pipeline_mode<synchronous>, transform_indices = @transform_8, window_bounds = array<i64: 64, 1>}, {transform_indices = @transform_9, window_bounds = array<i64: 1, 64, 128>}]} {
    %c0 = arith.constant 0 : index
    %c0_0 = arith.constant 0 : index
    %c0_1 = arith.constant 0 : index
    %0 = vector.load %arg1[%c0, %c0_0, %c0_1] : memref<1x64x128xf32, #tpu.memory_space<vmem>>, vector<1x64x128xf32>
    %1 = vector.shape_cast %0 : vector<1x64x128xf32> to vector<64x128xf32>
    %2 = arith.truncf %1 : vector<64x128xf32> to vector<64x128xbf16>
    %c0_2 = arith.constant 0 : index
    %c0_3 = arith.constant 0 : index
    %3 = vector.load %arg2[%c0_2, %c0_3] : memref<128x64xbf16, #tpu.memory_space<vmem>>, vector<128x64xbf16>
    %cst = arith.constant dense<0.000000e+00> : vector<64x64xf32>
    %4 = tpu.matmul %2, %3, %cst {dimension_numbers = #tpu.dot_dimension_numbers<[1], [0], [0], [1], [0, 0, 1, 1], [], []>} : vector<64x128xbf16>, vector<128x64xbf16>, vector<64x64xf32> -> vector<64x64xf32>
    %c0_4 = arith.constant 0 : index
    %c0_5 = arith.constant 0 : index
    %5 = vector.load %arg3[%c0_4, %c0_5] : memref<1x64xf32, #tpu.memory_space<vmem>>, vector<1x64xf32>
    %6 = vector.broadcast %5 : vector<1x64xf32> to vector<64x64xf32>
    %7 = arith.addf %4, %6 : vector<64x64xf32>
    %c0_6 = arith.constant 0 : index
    %c0_7 = arith.constant 0 : index
    %8 = vector.load %arg4[%c0_6, %c0_7] : memref<64x1xf32, #tpu.memory_space<vmem>>, vector<64x1xf32>
    %9 = vector.broadcast %8 : vector<64x1xf32> to vector<64x64xf32>
    %10 = arith.mulf %7, %9 : vector<64x64xf32>
    %c0_8 = arith.constant 0 : index
    %c0_9 = arith.constant 0 : index
    %11 = vector.load %arg5[%c0_8, %c0_9] : memref<64x1xf32, #tpu.memory_space<vmem>>, vector<64x1xf32>
    %12 = vector.broadcast %11 : vector<64x1xf32> to vector<64x64xf32>
    %13 = arith.addf %10, %12 : vector<64x64xf32>
    %cst_10 = arith.constant 0.000000e+00 : f32
    %14 = vector.broadcast %cst_10 : f32 to vector<64x64xf32>
    %15 = arith.maximumf %13, %14 : vector<64x64xf32>
    %16 = arith.truncf %15 : vector<64x64xf32> to vector<64x64xbf16>
    %c0_11 = arith.constant 0 : index
    %c0_12 = arith.constant 0 : index
    %17 = vector.load %arg6[%c0_11, %c0_12] : memref<64x128xbf16, #tpu.memory_space<vmem>>, vector<64x128xbf16>
    %cst_13 = arith.constant dense<0.000000e+00> : vector<64x128xf32>
    %18 = tpu.matmul %16, %17, %cst_13 {dimension_numbers = #tpu.dot_dimension_numbers<[1], [0], [0], [1], [0, 0, 1, 1], [], []>} : vector<64x64xbf16>, vector<64x128xbf16>, vector<64x128xf32> -> vector<64x128xf32>
    %c0_14 = arith.constant 0 : index
    %c0_15 = arith.constant 0 : index
    %19 = vector.load %arg7[%c0_14, %c0_15] : memref<1x128xf32, #tpu.memory_space<vmem>>, vector<1x128xf32>
    %20 = vector.broadcast %19 : vector<1x128xf32> to vector<64x128xf32>
    %21 = arith.addf %18, %20 : vector<64x128xf32>
    %22 = arith.truncf %21 : vector<64x128xf32> to vector<64x128xbf16>
    %c0_16 = arith.constant 0 : index
    %c0_17 = arith.constant 0 : index
    %23 = vector.load %arg8[%c0_16, %c0_17] : memref<64x64xbf16, #tpu.memory_space<vmem>>, vector<64x64xbf16>
    %cst_18 = arith.constant dense<0.000000e+00> : vector<64x128xf32>
    %24 = tpu.matmul %23, %2, %cst_18 {dimension_numbers = #tpu.dot_dimension_numbers<[1], [0], [0], [1], [0, 0, 1, 1], [], []>} : vector<64x64xbf16>, vector<64x128xbf16>, vector<64x128xf32> -> vector<64x128xf32>
    %c0_19 = arith.constant 0 : index
    %c0_20 = arith.constant 0 : index
    %25 = vector.load %arg9[%c0_19, %c0_20] : memref<64x1xf32, #tpu.memory_space<vmem>>, vector<64x1xf32>
    %26 = vector.broadcast %25 : vector<64x1xf32> to vector<64x128xf32>
    %27 = arith.addf %24, %26 : vector<64x128xf32>
    %cst_21 = arith.constant 0.000000e+00 : f32
    %28 = vector.broadcast %cst_21 : f32 to vector<64x128xf32>
    %29 = arith.maximumf %27, %28 : vector<64x128xf32>
    %30 = arith.truncf %29 : vector<64x128xf32> to vector<64x128xbf16>
    %cst_22 = arith.constant dense<0.000000e+00> : vector<128x128xf32>
    %31 = tpu.matmul %30, %22, %cst_22 {dimension_numbers = #tpu.dot_dimension_numbers<[0], [0], [1], [1], [0, 1, 1, 1], [], []>} : vector<64x128xbf16>, vector<64x128xbf16>, vector<128x128xf32> -> vector<128x128xf32>
    %cst_23 = arith.constant dense<0xFF800000> : vector<128xf32>
    %32 = vector.multi_reduction <maximumf>, %31, %cst_23 [1] : vector<128x128xf32> to vector<128xf32>
    %33 = vector.shape_cast %32 : vector<128xf32> to vector<128x1xf32>
    %34 = vector.broadcast %33 : vector<128x1xf32> to vector<128x128xf32>
    %35 = arith.subf %31, %34 : vector<128x128xf32>
    %36 = math.exp %35 : vector<128x128xf32>
    %cst_24 = arith.constant dense<0.000000e+00> : vector<128xf32>
    %37 = vector.multi_reduction <add>, %36, %cst_24 [1] : vector<128x128xf32> to vector<128xf32>
    %38 = vector.shape_cast %37 : vector<128xf32> to vector<128x1xf32>
    %39 = tpu.reciprocal %38 {approx = true} : vector<128x1xf32> -> vector<128x1xf32>
    %40 = vector.broadcast %39 : vector<128x1xf32> to vector<128x128xf32>
    %41 = arith.mulf %36, %40 : vector<128x128xf32>
    %42 = arith.truncf %41 : vector<128x128xf32> to vector<128x128xbf16>
    %cst_25 = arith.constant dense<0.000000e+00> : vector<64x128xf32>
    %43 = tpu.matmul %2, %42, %cst_25 {dimension_numbers = #tpu.dot_dimension_numbers<[1], [0], [0], [1], [0, 0, 1, 1], [], []>} : vector<64x128xbf16>, vector<128x128xbf16>, vector<64x128xf32> -> vector<64x128xf32>
    %c0_26 = arith.constant 0 : index
    %c0_27 = arith.constant 0 : index
    %c0_28 = arith.constant 0 : index
    %44 = vector.load %arg10[%c0_26, %c0_27, %c0_28] : memref<1x64x128xf32, #tpu.memory_space<vmem>>, vector<1x64x128xf32>
    %45 = vector.shape_cast %44 : vector<1x64x128xf32> to vector<64x128xf32>
    %46 = vector.shape_cast %43 : vector<64x128xf32> to vector<1x64x128xf32>
    tpu.vector_store %arg10[%c0_26, %c0_27, %c0_28], %46 {strides = array<i32>} : memref<1x64x128xf32, #tpu.memory_space<vmem>>, vector<1x64x128xf32>,
    return
  }
  func.func @transform_0(%arg0: i32) -> (i32, i32, i32) {
    %c0_i32 = arith.constant 0 : i32
    %c0_i32_0 = arith.constant 0 : i32
    %c0_i32_1 = arith.constant 0 : i32
    return %arg0, %c0_i32, %c0_i32_0 : i32, i32, i32
  }
  func.func @transform_1(%arg0: i32) -> (i32, i32) {
    %c0_i32 = arith.constant 0 : i32
    %c0_i32_0 = arith.constant 0 : i32
    %c0_i32_1 = arith.constant 0 : i32
    return %c0_i32, %c0_i32_0 : i32, i32
  }
  func.func @transform_2(%arg0: i32) -> (i32, i32) {
    %c0_i32 = arith.constant 0 : i32
    %c0_i32_0 = arith.constant 0 : i32
    %c0_i32_1 = arith.constant 0 : i32
    return %c0_i32, %c0_i32_0 : i32, i32
  }
  func.func @transform_3(%arg0: i32) -> (i32, i32) {
    %c0_i32 = arith.constant 0 : i32
    %c0_i32_0 = arith.constant 0 : i32
    %c0_i32_1 = arith.constant 0 : i32
    return %c0_i32, %c0_i32_0 : i32, i32
  }
  func.func @transform_4(%arg0: i32) -> (i32, i32) {
    %c0_i32 = arith.constant 0 : i32
    %c0_i32_0 = arith.constant 0 : i32
    %c0_i32_1 = arith.constant 0 : i32
    return %c0_i32, %c0_i32_0 : i32, i32
  }
  func.func @transform_5(%arg0: i32) -> (i32, i32) {
    %c0_i32 = arith.constant 0 : i32
    %c0_i32_0 = arith.constant 0 : i32
    %c0_i32_1 = arith.constant 0 : i32
    return %c0_i32, %c0_i32_0 : i32, i32
  }
  func.func @transform_6(%arg0: i32) -> (i32, i32) {
    %c0_i32 = arith.constant 0 : i32
    %c0_i32_0 = arith.constant 0 : i32
    %c0_i32_1 = arith.constant 0 : i32
    return %c0_i32, %c0_i32_0 : i32, i32
  }
  func.func @transform_7(%arg0: i32) -> (i32, i32) {
    %c0_i32 = arith.constant 0 : i32
    %c0_i32_0 = arith.constant 0 : i32
    %c0_i32_1 = arith.constant 0 : i32
    return %c0_i32, %c0_i32_0 : i32, i32
  }
  func.func @transform_8(%arg0: i32) -> (i32, i32) {
    %c0_i32 = arith.constant 0 : i32
    %c0_i32_0 = arith.constant 0 : i32
    %c0_i32_1 = arith.constant 0 : i32
    return %c0_i32, %c0_i32_0 : i32, i32
  }
  func.func @transform_9(%arg0: i32) -> (i32, i32, i32) {
    %c0_i32 = arith.constant 0 : i32
    %c0_i32_0 = arith.constant 0 : i32
    %c0_i32_1 = arith.constant 0 : i32
    return %arg0, %c0_i32, %c0_i32_0 : i32, i32, i32
  }
}

</mosaic_0001>

<llo_original>
// kernel: tpu_custom_call.1
$region0: #{tpu_custom_call.1}
  #allocation0 [shape = 'u32[]', space=smem, size = 0x4, offset = 0x4, fixed_abs, tag = 'smem constant byte address 0x4 - core index']
  #allocation1 [shape = 'u32[144,128]{1,0:T(1,128)}', space=vmem, size = 0x12000, scoped, tag = 'internal scratch']
  %s0 = inlined_call_operand.vmem [shape: f32[2,64,128], index: 0, kind: input, shape index: {}]
  %s1 = inlined_call_operand.vmem [shape: bf16[128,64], index: 1, kind: input, shape index: {}]
  %s2 = inlined_call_operand.vmem [shape: f32[1,64], index: 2, kind: input, shape index: {}]
  %s3 = inlined_call_operand.vmem [shape: f32[64,1], index: 3, kind: input, shape index: {}]
  %s4 = inlined_call_operand.vmem [shape: f32[64,1], index: 4, kind: input, shape index: {}]
  %s5 = inlined_call_operand.vmem [shape: bf16[64,128], index: 5, kind: input, shape index: {}]
  %s6 = inlined_call_operand.vmem [shape: f32[1,128], index: 6, kind: input, shape index: {}]
  %s7 = inlined_call_operand.vmem [shape: bf16[64,64], index: 7, kind: input, shape index: {}]
  %s8 = inlined_call_operand.vmem [shape: f32[64,1], index: 8, kind: input, shape index: {}]
  %s9 = inlined_call_operand.hbm [shape: f32[2,64,128], index: 9, kind: output, shape index: {}]
  %s10 = sld [smem:[#allocation0]]
  $region69: #{tpu_custom_call.1} parent=0
    _
  %s12 = ssub.s32 1, %s10
  %s13 = scalar_select 0, %s12, %s10
  $region1: #{tpu_custom_call.1} parent=0
    #allocation2 [shape = 'u8[65536]{0}', space=vmem, size = 0x10000, scoped, tag = 'output window, operand 0']
    #allocation3 [shape = 's32[2]{0}', space=sflag, size = 0x8, scoped, tag = 'scoped memory for tpu_custom_call.1']
    %14 = vsyncpa [#allocation3], 0
    %s15 = scalar_lea.sflag [#allocation3], 1
    %16 = vsyncpa %s15, 0
    loop: start=0, step=1, limit=4
    $region2: #{tpu_custom_call.1} parent=1 // loop_pre_header
      _
    $region3: #{tpu_custom_call.1} parent=1 // loop_header
      %s18 = sphi 0, %s22
      %p19 = scmp.ge.s32.totalorder %s18, 4
      %s28 = sphi 0, %s30
      %s31 = sphi 0, %s28
      %s32 = sphi 0, %s31
      %s48 = sphi 0, %s32
      %s52 = sphi 0, %s52
      %s54 = sphi 0, %s52
      %s55 = sphi 0, %s54
      %s69 = sphi 0, %s55
      %s73 = sphi 0, %s73
      %s75 = sphi 0, %s73
      %s76 = sphi 0, %s75
      %s90 = sphi 0, %s76
      %s94 = sphi 0, %s94
      %s96 = sphi 0, %s94
      %s97 = sphi 0, %s96
      %s111 = sphi 0, %s97
      %s115 = sphi 0, %s115
      %s117 = sphi 0, %s115
      %s118 = sphi 0, %s117
      %s132 = sphi 0, %s118
      %s136 = sphi 0, %s136
      %s138 = sphi 0, %s136
      %s139 = sphi 0, %s138
      %s153 = sphi 0, %s139
      %s157 = sphi 0, %s157
      %s159 = sphi 0, %s157
      %s160 = sphi 0, %s159
      %s174 = sphi 0, %s160
      %s178 = sphi 0, %s178
      %s180 = sphi 0, %s178
      %s181 = sphi 0, %s180
      %s195 = sphi 0, %s181
      %s199 = sphi 0, %s199
      %s201 = sphi 0, %s199
      %s202 = sphi 0, %s201
      %s216 = sphi 0, %s202
      %s222 = sphi 0, %s224
      %s225 = sphi 0, %s222
      %s226 = sphi 0, %s225
      %s242 = sphi 0, %s226
    $region4: #{tpu_custom_call.1} parent=1 // loop_header_branch
      %21 = sbr.rel (%p19) target = $region8
    $region5: #{tpu_custom_call.1} parent=1 // loop_body
      %s23 = ssub.s32 %s18, 1
      %s24 = ssub.s32 %s18, 2
      %s25 = sadd.s32 %s18, 1
      %s26 = ssub.s32 %s18, %s25
      %p27 = scmp.eq.s32.totalorder %s26, 0
      %s29 = sadd.s32 %s28, 1
      %s30 = scalar_select %p27, %s28, %s29
      %p33 = pneg %p27
      %p34 = scmp.eq.s32.totalorder %s18, 1
      %p35 = por %p33, %p34
      %p36 = scmp.ne.s32.totalorder %s28, %s31
      %p37 = scmp.eq.s32.totalorder %s18, 0
      %p38 = por %p36, %p37
      %p39 = scmp.ne.s32.totalorder %s28, %s31
      %p40 = scmp.eq.s32.totalorder %s23, 1
      %p41 = por %p39, %p40
      %p42 = scmp.ne.s32.totalorder %s31, %s32
      %p43 = scmp.eq.s32.totalorder %s23, 0
      %p44 = por %p42, %p43
      %p45 = scmp.ne.s32.totalorder %s31, %s32
      %p46 = scmp.eq.s32.totalorder %s24, 1
      %p47 = por %p45, %p46
      %p49 = scmp.ne.s32.totalorder %s32, %s48
      %p50 = scmp.eq.s32.totalorder %s24, 0
      %p51 = por %p49, %p50
      %s53 = sadd.s32 %s52, 1
      %p56 = scmp.eq.s32.totalorder %s18, 1
      %p57 = scmp.ne.s32.totalorder %s52, %s54
      %p58 = scmp.eq.s32.totalorder %s18, 0
      %p59 = por %p57, %p58
      %p60 = scmp.ne.s32.totalorder %s52, %s54
      %p61 = scmp.eq.s32.totalorder %s23, 1
      %p62 = por %p60, %p61
      %p63 = scmp.ne.s32.totalorder %s54, %s55
      %p64 = scmp.eq.s32.totalorder %s23, 0
      %p65 = por %p63, %p64
      %p66 = scmp.ne.s32.totalorder %s54, %s55
      %p67 = scmp.eq.s32.totalorder %s24, 1
      %p68 = por %p66, %p67
      %p70 = scmp.ne.s32.totalorder %s55, %s69
      %p71 = scmp.eq.s32.totalorder %s24, 0
      %p72 = por %p70, %p71
      %s74 = sadd.s32 %s73, 1
      %p77 = scmp.eq.s32.totalorder %s18, 1
      %p78 = scmp.ne.s32.totalorder %s73, %s75
      %p79 = scmp.eq.s32.totalorder %s18, 0
      %p80 = por %p78, %p79
      %p81 = scmp.ne.s32.totalorder %s73, %s75
      %p82 = scmp.eq.s32.totalorder %s23, 1
      %p83 = por %p81, %p82
      %p84 = scmp.ne.s32.totalorder %s75, %s76
      %p85 = scmp.eq.s32.totalorder %s23, 0
      %p86 = por %p84, %p85
      %p87 = scmp.ne.s32.totalorder %s75, %s76
      %p88 = scmp.eq.s32.totalorder %s24, 1
      %p89 = por %p87, %p88
      %p91 = scmp.ne.s32.totalorder %s76, %s90
      %p92 = scmp.eq.s32.totalorder %s24, 0
      %p93 = por %p91, %p92
      %s95 = sadd.s32 %s94, 1
      %p98 = scmp.eq.s32.totalorder %s18, 1
      %p99 = scmp.ne.s32.totalorder %s94, %s96
      %p100 = scmp.eq.s32.totalorder %s18, 0
      %p101 = por %p99, %p100
      %p102 = scmp.ne.s32.totalorder %s94, %s96
      %p103 = scmp.eq.s32.totalorder %s23, 1
      %p104 = por %p102, %p103
      %p105 = scmp.ne.s32.totalorder %s96, %s97
      %p106 = scmp.eq.s32.totalorder %s23, 0
      %p107 = por %p105, %p106
      %p108 = scmp.ne.s32.totalorder %s96, %s97
      %p109 = scmp.eq.s32.totalorder %s24, 1
      %p110 = por %p108, %p109
      %p112 = scmp.ne.s32.totalorder %s97, %s111
      %p113 = scmp.eq.s32.totalorder %s24, 0
      %p114 = por %p112, %p113
      %s116 = sadd.s32 %s115, 1
      %p119 = scmp.eq.s32.totalorder %s18, 1
      %p120 = scmp.ne.s32.totalorder %s115, %s117
      %p121 = scmp.eq.s32.totalorder %s18, 0
      %p122 = por %p120, %p121
      %p123 = scmp.ne.s32.totalorder %s115, %s117
      %p124 = scmp.eq.s32.totalorder %s23, 1
      %p125 = por %p123, %p124
      %p126 = scmp.ne.s32.totalorder %s117, %s118
      %p127 = scmp.eq.s32.totalorder %s23, 0
      %p128 = por %p126, %p127
      %p129 = scmp.ne.s32.totalorder %s117, %s118
      %p130 = scmp.eq.s32.totalorder %s24, 1
      %p131 = por %p129, %p130
      %p133 = scmp.ne.s32.totalorder %s118, %s132
      %p134 = scmp.eq.s32.totalorder %s24, 0
      %p135 = por %p133, %p134
      %s137 = sadd.s32 %s136, 1
      %p140 = scmp.eq.s32.totalorder %s18, 1
      %p141 = scmp.ne.s32.totalorder %s136, %s138
      %p142 = scmp.eq.s32.totalorder %s18, 0
      %p143 = por %p141, %p142
      %p144 = scmp.ne.s32.totalorder %s136, %s138
      %p145 = scmp.eq.s32.totalorder %s23, 1
      %p146 = por %p144, %p145
      %p147 = scmp.ne.s32.totalorder %s138, %s139
      %p148 = scmp.eq.s32.totalorder %s23, 0
      %p149 = por %p147, %p148
      %p150 = scmp.ne.s32.totalorder %s138, %s139
      %p151 = scmp.eq.s32.totalorder %s24, 1
      %p152 = por %p150, %p151
      %p154 = scmp.ne.s32.totalorder %s139, %s153
      %p155 = scmp.eq.s32.totalorder %s24, 0
      %p156 = por %p154, %p155
      %s158 = sadd.s32 %s157, 1
      %p161 = scmp.eq.s32.totalorder %s18, 1
      %p162 = scmp.ne.s32.totalorder %s157, %s159
      %p163 = scmp.eq.s32.totalorder %s18, 0
      %p164 = por %p162, %p163
      %p165 = scmp.ne.s32.totalorder %s157, %s159
      %p166 = scmp.eq.s32.totalorder %s23, 1
      %p167 = por %p165, %p166
      %p168 = scmp.ne.s32.totalorder %s159, %s160
      %p169 = scmp.eq.s32.totalorder %s23, 0
      %p170 = por %p168, %p169
      %p171 = scmp.ne.s32.totalorder %s159, %s160
      %p172 = scmp.eq.s32.totalorder %s24, 1
      %p173 = por %p171, %p172
      %p175 = scmp.ne.s32.totalorder %s160, %s174
      %p176 = scmp.eq.s32.totalorder %s24, 0
      %p177 = por %p175, %p176
      %s179 = sadd.s32 %s178, 1
      %p182 = scmp.eq.s32.totalorder %s18, 1
      %p183 = scmp.ne.s32.totalorder %s178, %s180
      %p184 = scmp.eq.s32.totalorder %s18, 0
      %p185 = por %p183, %p184
      %p186 = scmp.ne.s32.totalorder %s178, %s180
      %p187 = scmp.eq.s32.totalorder %s23, 1
      %p188 = por %p186, %p187
      %p189 = scmp.ne.s32.totalorder %s180, %s181
      %p190 = scmp.eq.s32.totalorder %s23, 0
      %p191 = por %p189, %p190
      %p192 = scmp.ne.s32.totalorder %s180, %s181
      %p193 = scmp.eq.s32.totalorder %s24, 1
      %p194 = por %p192, %p193
      %p196 = scmp.ne.s32.totalorder %s181, %s195
      %p197 = scmp.eq.s32.totalorder %s24, 0
      %p198 = por %p196, %p197
      %s200 = sadd.s32 %s199, 1
      %p203 = scmp.eq.s32.totalorder %s18, 1
      %p204 = scmp.ne.s32.totalorder %s199, %s201
      %p205 = scmp.eq.s32.totalorder %s18, 0
      %p206 = por %p204, %p205
      %p207 = scmp.ne.s32.totalorder %s199, %s201
      %p208 = scmp.eq.s32.totalorder %s23, 1
      %p209 = por %p207, %p208
      %p210 = scmp.ne.s32.totalorder %s201, %s202
      %p211 = scmp.eq.s32.totalorder %s23, 0
      %p212 = por %p210, %p211
      %p213 = scmp.ne.s32.totalorder %s201, %s202
      %p214 = scmp.eq.s32.totalorder %s24, 1
      %p215 = por %p213, %p214
      %p217 = scmp.ne.s32.totalorder %s202, %s216
      %p218 = scmp.eq.s32.totalorder %s24, 0
      %p219 = por %p217, %p218
      %s220 = ssub.s32 %s18, %s25
      %p221 = scmp.eq.s32.totalorder %s220, 0
      %s223 = sadd.s32 %s222, 1
      %s224 = scalar_select %p221, %s222, %s223
      %p227 = pneg %p221
      %p228 = scmp.eq.s32.totalorder %s18, 1
      %p229 = por %p227, %p228
      %p230 = scmp.ne.s32.totalorder %s222, %s225
      %p231 = scmp.eq.s32.totalorder %s18, 0
      %p232 = por %p230, %p231
      %p233 = scmp.ne.s32.totalorder %s222, %s225
      %p234 = scmp.eq.s32.totalorder %s23, 1
      %p235 = por %p233, %p234
      %p236 = scmp.ne.s32.totalorder %s225, %s226
      %p237 = scmp.eq.s32.totalorder %s23, 0
      %p238 = por %p236, %p237
      %p239 = scmp.ne.s32.totalorder %s225, %s226
      %p240 = scmp.eq.s32.totalorder %s24, 1
      %p241 = por %p239, %p240
      %p243 = scmp.ne.s32.totalorder %s226, %s242
      %p244 = scmp.eq.s32.totalorder %s24, 0
      %p245 = por %p243, %p244
      %p246 = scmp.le.s32.totalorder 1, %s18
      %p247 = scmp.lt.s32.totalorder %s18, 3
      %p248 = pnand %p246, %p247
      %p249 = pneg %p248
      // Predicated region
      $region9: #{tpu_custom_call.1} parent=5 // pred_check
        _
      $region10: #{tpu_custom_call.1} parent=5 // pred_check_branch
        %251 = sbr.rel (%p248) target = $region12
      $region11: #{tpu_custom_call.1} parent=5 // pred_region
        %s252 = ssub.s32 %s18, 1
        // Predicated region
        $region13: #{tpu_custom_call.1} parent=11 // pred_check
          %p253 = pneg %p65
        $region14: #{tpu_custom_call.1} parent=11 // pred_check_branch
          %255 = sbr.rel (%p253) target = $region16
        $region15: #{tpu_custom_call.1} parent=11 // pred_region
          _
        $region16: #{tpu_custom_call.1} parent=11 // pred_fallthru
          _
        // Predicated region
        $region17: #{tpu_custom_call.1} parent=11 // pred_check
          %p256 = pneg %p86
        $region18: #{tpu_custom_call.1} parent=11 // pred_check_branch
          %258 = sbr.rel (%p256) target = $region20
        $region19: #{tpu_custom_call.1} parent=11 // pred_region
          _
        $region20: #{tpu_custom_call.1} parent=11 // pred_fallthru
          _
        // Predicated region
        $region21: #{tpu_custom_call.1} parent=11 // pred_check
          %p259 = pneg %p107
        $region22: #{tpu_custom_call.1} parent=11 // pred_check_branch
          %261 = sbr.rel (%p259) target = $region24
        $region23: #{tpu_custom_call.1} parent=11 // pred_region
          _
        $region24: #{tpu_custom_call.1} parent=11 // pred_fallthru
          _
        // Predicated region
        $region25: #{tpu_custom_call.1} parent=11 // pred_check
          %p262 = pneg %p128
        $region26: #{tpu_custom_call.1} parent=11 // pred_check_branch
          %264 = sbr.rel (%p262) target = $region28
        $region27: #{tpu_custom_call.1} parent=11 // pred_region
          _
        $region28: #{tpu_custom_call.1} parent=11 // pred_fallthru
          _
        // Predicated region
        $region29: #{tpu_custom_call.1} parent=11 // pred_check
          %p265 = pneg %p149
        $region30: #{tpu_custom_call.1} parent=11 // pred_check_branch
          %267 = sbr.rel (%p265) target = $region32
        $region31: #{tpu_custom_call.1} parent=11 // pred_region
          _
        $region32: #{tpu_custom_call.1} parent=11 // pred_fallthru
          _
        // Predicated region
        $region33: #{tpu_custom_call.1} parent=11 // pred_check
          %p268 = pneg %p170
        $region34: #{tpu_custom_call.1} parent=11 // pred_check_branch
          %270 = sbr.rel (%p268) target = $region36
        $region35: #{tpu_custom_call.1} parent=11 // pred_region
          _
        $region36: #{tpu_custom_call.1} parent=11 // pred_fallthru
          _
        // Predicated region
        $region37: #{tpu_custom_call.1} parent=11 // pred_check
          %p271 = pneg %p191
        $region38: #{tpu_custom_call.1} parent=11 // pred_check_branch
          %273 = sbr.rel (%p271) target = $region40
        $region39: #{tpu_custom_call.1} parent=11 // pred_region
          _
        $region40: #{tpu_custom_call.1} parent=11 // pred_fallthru
          _
        // Predicated region
        $region41: #{tpu_custom_call.1} parent=11 // pred_check
          %p274 = pneg %p212
        $region42: #{tpu_custom_call.1} parent=11 // pred_check_branch
          %276 = sbr.rel (%p274) target = $region44
        $region43: #{tpu_custom_call.1} parent=11 // pred_region
          _
        $region44: #{tpu_custom_call.1} parent=11 // pred_fallthru
          _
      $region12: #{tpu_custom_call.1} parent=5 // pred_fallthru
        _
      %p277 = scmp.lt.s32.totalorder %s18, 2
      // Predicated region
      $region45: #{tpu_custom_call.1} parent=5 // pred_check
        %p278 = pneg %p277
      $region46: #{tpu_custom_call.1} parent=5 // pred_check_branch
        %280 = sbr.rel (%p278) target = $region48
      $region47: #{tpu_custom_call.1} parent=5 // pred_region
        // Predicated region
        $region49: #{tpu_custom_call.1} parent=47 // pred_check
          %p281 = pneg %p38
        $region50: #{tpu_custom_call.1} parent=47 // pred_check_branch
          %283 = sbr.rel (%p281) target = $region52
        $region51: #{tpu_custom_call.1} parent=47 // pred_region
          %p284 = scmp.lt.s32.totalorder %s18, 1
          %s285 = scalar_select %p284, %s18, 1
          %s286 = smul.addr %s285, 8
          %s287 = smul.addr %s286, 8
          %s288 = scalar_lea.vmem %s0, %s287
        $region52: #{tpu_custom_call.1} parent=47 // pred_fallthru
          _
      $region48: #{tpu_custom_call.1} parent=5 // pred_fallthru
        _
      %p289 = scmp.le.s32.totalorder 1, %s18
      %p290 = scmp.lt.s32.totalorder %s18, 3
      %p291 = pnand %p289, %p290
      %p292 = pneg %p291
      // Predicated region
      $region53: #{tpu_custom_call.1} parent=5 // pred_check
        _
      $region54: #{tpu_custom_call.1} parent=5 // pred_check_branch
        %294 = sbr.rel (%p291) target = $region56
      $region55: #{tpu_custom_call.1} parent=5 // pred_region
        %s295 = ssub.s32 %s18, 1
        %p296 = scmp.lt.s32.totalorder %s23, 1
        %s297 = scalar_select %p296, %s23, 1
        %s298 = smul.addr %s297, 8
        %s299 = smul.addr %s298, 8
        %s300 = scalar_lea.vmem %s0, %s299
        %p301 = pneg %p44
        %p302 = pneg %p41
        %p303 = pneg %p65
        %p304 = pneg %p62
        %p305 = pneg %p86
        %p306 = pneg %p83
        %p307 = pneg %p107
        %p308 = pneg %p104
        %p309 = pneg %p128
        %p310 = pneg %p125
        %p311 = pneg %p149
        %p312 = pneg %p146
        %p313 = pneg %p170
        %p314 = pneg %p167
        %p315 = pneg %p191
        %p316 = pneg %p188
        %p317 = pneg %p212
        %p318 = pneg %p209
        %p319 = pneg %p238
        %p320 = pneg %p235
        %s321 = sand.u32 %s225, 1
        %s322 = scalar_lea.sflag [#allocation3], %s321
        %s323 = sand.u32 %s225, 1
        %s324 = smul.addr %s323, 64
        %s325 = scalar_lea.vmem [#allocation2], %s324
        %p326 = scmp.lt.s32.totalorder %s23, 1
        %s327 = scalar_select %p326, %s23, 1
        %s328 = smul.addr %s327, 8
        %s329 = smul.addr %s328, 8
        %s330 = scalar_lea.vmem %s0, %s329
        %v332 = vld [vmem:[%s330] sm:$0xff]
        %v333 = vld [vmem:[%s330 + $0x8] sm:$0xff]
        %v334 = vld [vmem:[%s330 + $0x10] sm:$0xff]
        %v335 = vld [vmem:[%s330 + $0x18] sm:$0xff]
        %v336 = vld [vmem:[%s330 + $0x20] sm:$0xff]
        %v337 = vld [vmem:[%s330 + $0x28] sm:$0xff]
        %v338 = vld [vmem:[%s330 + $0x30] sm:$0xff]
        %v339 = vld [vmem:[%s330 + $0x38] sm:$0xff]
        %v340 = vpack.c.bf16 %v333, %v332
        %v341 = vpack.c.bf16 %v335, %v334
        %v342 = vpack.c.bf16 %v337, %v336
        %v343 = vpack.c.bf16 %v339, %v338
        %v344 = vld [vmem:[%s1] sm:$0xf]
        %v345 = vld [vmem:[%s1 + $0x4] sm:$0xf]
        %v346 = vld [vmem:[%s1 + $0x8] sm:$0xf]
        %v347 = vld [vmem:[%s1 + $0xc] sm:$0xf]
        %v348 = vld [vmem:[%s1 + $0x10] sm:$0xf]
        %v349 = vld [vmem:[%s1 + $0x14] sm:$0xf]
        %v350 = vld [vmem:[%s1 + $0x18] sm:$0xf]
        %v351 = vld [vmem:[%s1 + $0x1c] sm:$0xf]
        %v352 = vld [vmem:[%s1 + $0x20] sm:$0xf]
        %v353 = vld [vmem:[%s1 + $0x24] sm:$0xf]
        %v354 = vld [vmem:[%s1 + $0x28] sm:$0xf]
        %v355 = vld [vmem:[%s1 + $0x2c] sm:$0xf]
        %v356 = vld [vmem:[%s1 + $0x30] sm:$0xf]
        %v357 = vld [vmem:[%s1 + $0x34] sm:$0xf]
        %v358 = vld [vmem:[%s1 + $0x38] sm:$0xf]
        %v359 = vld [vmem:[%s1 + $0x3c] sm:$0xf]
        %v360 = vld [vmem:[%s2] sm:$0x1]
        %v362 = vlaneseq
        %v363 = vshrl.u32 %v362, 7
        %v364 = vsub.s32 0, %v363
        %v365 = vrot.slane %v360, %v364
        %v383 = vunpack.c.l.b16 %v344
        %v384 = vunpack.c.l.b16 %v345
        %v385 = vunpack.c.l.b16 %v346
        %v386 = vunpack.c.l.b16 %v347
        %v387 = vunpack.c.l.b16 %v348
        %v388 = vunpack.c.l.b16 %v349
        %v389 = vunpack.c.l.b16 %v350
        %v390 = vunpack.c.l.b16 %v351
        %v391 = vunpack.c.l.b16 %v352
        %v392 = vunpack.c.l.b16 %v353
        %v393 = vunpack.c.l.b16 %v354
        %v394 = vunpack.c.l.b16 %v355
        %v395 = vunpack.c.l.b16 %v356
        %v396 = vunpack.c.l.b16 %v357
        %v397 = vunpack.c.l.b16 %v358
        %v398 = vunpack.c.l.b16 %v359
        %v399 = vpack.c.b16 %v384, %v383
        %v400 = vpack.c.b16 %v386, %v385
        %v401 = vpack.c.b16 %v388, %v387
        %v402 = vpack.c.b16 %v390, %v389
        %v403 = vpack.c.b16 %v392, %v391
        %v404 = vpack.c.b16 %v394, %v393
        %v405 = vpack.c.b16 %v396, %v395
        %v406 = vpack.c.b16 %v398, %v397
        %415 = vmatprep.subr.bf16.mxu0 0
        %416 = vmatpush1.bf16.msra.mxu0 %v406
        %417 = vmatprep.subr.bf16.mxu0 0
        %418 = vmatpush1.bf16.msra.mxu0 %v405
        %419 = vmatprep.subr.bf16.mxu0 0
        %420 = vmatpush1.bf16.msra.mxu0 %v404
        %421 = vmatprep.subr.bf16.mxu0 0
        %422 = vmatpush1.bf16.msra.mxu0 %v403
        %423 = vmatprep.subr.bf16.mxu0 0
        %424 = vmatpush1.bf16.msra.mxu0 %v402
        %425 = vmatprep.subr.bf16.mxu0 0
        %426 = vmatpush1.bf16.msra.mxu0 %v401
        %427 = vmatprep.subr.bf16.mxu0 0
        %428 = vmatpush1.bf16.msra.mxu0 %v400
        %429 = vmatprep.subr.bf16.mxu0 0
        %430 = vmatpush1.bf16.msra.mxu0 %v399
        %431 = vmatprep.subr.bf16.mxu0 0
        %432 = vmatpush2.bf16.msra.mxu0 0
        %433 = vmatprep.subr.bf16.mxu0 0
        %434 = vmatpush2.bf16.msra.mxu0 0
        %435 = vmatprep.subr.bf16.mxu0 0
        %436 = vmatpush2.bf16.msra.mxu0 0
        %437 = vmatprep.subr.bf16.mxu0 0
        %438 = vmatpush2.bf16.msra.mxu0 0
        %439 = vmatprep.subr.bf16.mxu0 0
        %440 = vmatpush2.bf16.msra.mxu0 0
        %441 = vmatprep.subr.bf16.mxu0 0
        %442 = vmatpush2.bf16.msra.mxu0 0
        %443 = vmatprep.subr.bf16.mxu0 0
        %444 = vmatpush2.bf16.msra.mxu0 0
        %445 = vmatprep.subr.bf16.mxu0 0
        %446 = vmatpush2.bf16.msra.mxu0 0
        %447 = vmatprep.mubr.bf16.mxu0 0
        %448 = vmatmul.mubr.bf16.gmra.mxu0 %v340
        %v449 = vpop.f32.mrf.mxu0
        %v450 = vadd.f32 %v365, %v449
        %v451 = vpop.f32.mrf.mxu0
        %v452 = vpop.f32.mrf.mxu0
        %v453 = vadd.f32 %v365, %v452
        %v454 = vpop.f32.mrf.mxu0
        %455 = vmatprep.mubr.bf16.mxu0 0
        %456 = vmatmul.mubr.bf16.gmra.mxu0 %v341
        %v457 = vpop.f32.mrf.mxu0
        %v458 = vadd.f32 %v365, %v457
        %v459 = vpop.f32.mrf.mxu0
        %v460 = vpop.f32.mrf.mxu0
        %v461 = vadd.f32 %v365, %v460
        %v462 = vpop.f32.mrf.mxu0
        %463 = vmatprep.mubr.bf16.mxu0 0
        %464 = vmatmul.mubr.bf16.gmra.mxu0 %v342
        %v465 = vpop.f32.mrf.mxu0
        %v466 = vadd.f32 %v365, %v465
        %v467 = vpop.f32.mrf.mxu0
        %v468 = vpop.f32.mrf.mxu0
        %v469 = vadd.f32 %v365, %v468
        %v470 = vpop.f32.mrf.mxu0
        %471 = vmatprep.mubr.bf16.mxu0 0
        %472 = vmatmul.mubr.bf16.gmra.mxu0 %v343
        %v473 = vpop.f32.mrf.mxu0
        %v474 = vadd.f32 %v365, %v473
        %v475 = vpop.f32.mrf.mxu0
        %v476 = vpop.f32.mrf.mxu0
        %v477 = vadd.f32 %v365, %v476
        %v478 = vpop.f32.mrf.mxu0
        %479 = vdwg.mxu0
        %v480 = vld [vmem:[%s3] sm:$0xff]
        %v481 = vld [vmem:[%s3 + $0x8] sm:$0xff]
        %v482 = vld [vmem:[%s3 + $0x10] sm:$0xff]
        %v483 = vld [vmem:[%s3 + $0x18] sm:$0xff]
        %v484 = vld [vmem:[%s3 + $0x20] sm:$0xff]
        %v485 = vld [vmem:[%s3 + $0x28] sm:$0xff]
        %v486 = vld [vmem:[%s3 + $0x30] sm:$0xff]
        %v487 = vld [vmem:[%s3 + $0x38] sm:$0xff]
        %489 = vset.pattern.permute.xlu0 0
        %490 = vperm.xlu0 %489, %v480
        %v491 = vpop.permute.xlu0 %490
        %494 = vset.pattern.permute.xlu0 0
        %495 = vperm.xlu0 %494, %v481
        %v496 = vpop.permute.xlu0 %495
        %499 = vset.pattern.permute.xlu0 0
        %500 = vperm.xlu0 %499, %v482
        %v501 = vpop.permute.xlu0 %500
        %504 = vset.pattern.permute.xlu0 0
        %505 = vperm.xlu0 %504, %v483
        %v506 = vpop.permute.xlu0 %505
        %509 = vset.pattern.permute.xlu0 0
        %510 = vperm.xlu0 %509, %v484
        %v511 = vpop.permute.xlu0 %510
        %514 = vset.pattern.permute.xlu0 0
        %515 = vperm.xlu0 %514, %v485
        %v516 = vpop.permute.xlu0 %515
        %519 = vset.pattern.permute.xlu0 0
        %520 = vperm.xlu0 %519, %v486
        %v521 = vpop.permute.xlu0 %520
        %524 = vset.pattern.permute.xlu0 0
        %525 = vperm.xlu0 %524, %v487
        %v526 = vpop.permute.xlu0 %525
        %v528 = vmul.f32 %v450, %v491
        %v529 = vmul.f32 %v453, %v496
        %v530 = vmul.f32 %v458, %v501
        %v531 = vmul.f32 %v461, %v506
        %v532 = vmul.f32 %v466, %v511
        %v533 = vmul.f32 %v469, %v516
        %v534 = vmul.f32 %v474, %v521
        %v535 = vmul.f32 %v477, %v526
        %v536 = vld [vmem:[%s4] sm:$0xff]
        %v537 = vld [vmem:[%s4 + $0x8] sm:$0xff]
        %v538 = vld [vmem:[%s4 + $0x10] sm:$0xff]
        %v539 = vld [vmem:[%s4 + $0x18] sm:$0xff]
        %v540 = vld [vmem:[%s4 + $0x20] sm:$0xff]
        %v541 = vld [vmem:[%s4 + $0x28] sm:$0xff]
        %v542 = vld [vmem:[%s4 + $0x30] sm:$0xff]
        %v543 = vld [vmem:[%s4 + $0x38] sm:$0xff]
        %545 = vset.pattern.permute.xlu0 0
        %546 = vperm.xlu0 %545, %v536
        %v547 = vpop.permute.xlu0 %546
        %550 = vset.pattern.permute.xlu0 0
        %551 = vperm.xlu0 %550, %v537
        %v552 = vpop.permute.xlu0 %551
        %555 = vset.pattern.permute.xlu0 0
        %556 = vperm.xlu0 %555, %v538
        %v557 = vpop.permute.xlu0 %556
        %560 = vset.pattern.permute.xlu0 0
        %561 = vperm.xlu0 %560, %v539
        %v562 = vpop.permute.xlu0 %561
        %565 = vset.pattern.permute.xlu0 0
        %566 = vperm.xlu0 %565, %v540
        %v567 = vpop.permute.xlu0 %566
        %570 = vset.pattern.permute.xlu0 0
        %571 = vperm.xlu0 %570, %v541
        %v572 = vpop.permute.xlu0 %571
        %575 = vset.pattern.permute.xlu0 0
        %576 = vperm.xlu0 %575, %v542
        %v577 = vpop.permute.xlu0 %576
        %580 = vset.pattern.permute.xlu0 0
        %581 = vperm.xlu0 %580, %v543
        %v582 = vpop.permute.xlu0 %581
        %v584 = vadd.f32 %v528, %v547
        %v585 = vadd.f32 %v529, %v552
        %v586 = vadd.f32 %v530, %v557
        %v587 = vadd.f32 %v531, %v562
        %v588 = vadd.f32 %v532, %v567
        %v589 = vadd.f32 %v533, %v572
        %v590 = vadd.f32 %v534, %v577
        %v591 = vadd.f32 %v535, %v582
        %v592 = vmax.f32 %v584, 0.0
        %v593 = vmax.f32 %v585, 0.0
        %v594 = vmax.f32 %v586, 0.0
        %v595 = vmax.f32 %v587, 0.0
        %v596 = vmax.f32 %v588, 0.0
        %v597 = vmax.f32 %v589, 0.0
        %v598 = vmax.f32 %v590, 0.0
        %v599 = vmax.f32 %v591, 0.0
        %v600 = vpack.c.bf16 %v593, %v592
        %v601 = vpack.c.bf16 %v595, %v594
        %v602 = vpack.c.bf16 %v597, %v596
        %v603 = vpack.c.bf16 %v599, %v598
        %v604 = vld [vmem:[%s5] sm:$0xf]
        %v605 = vld [vmem:[%s5 + $0x4] sm:$0xf]
        %v606 = vld [vmem:[%s5 + $0x8] sm:$0xf]
        %v607 = vld [vmem:[%s5 + $0xc] sm:$0xf]
        %v608 = vld [vmem:[%s5 + $0x10] sm:$0xf]
        %v609 = vld [vmem:[%s5 + $0x14] sm:$0xf]
        %v610 = vld [vmem:[%s5 + $0x18] sm:$0xf]
        %v611 = vld [vmem:[%s5 + $0x1c] sm:$0xf]
        %v612 = vld [vmem:[%s6] sm:$0x1]
        %v614 = vlaneseq
        %v615 = vshrl.u32 %v614, 7
        %v616 = vsub.s32 0, %v615
        %v617 = vrot.slane %v612, %v616
        %v627 = vunpack.c.l.b16 %v604
        %v628 = vunpack.c.l.b16 %v605
        %v629 = vunpack.c.l.b16 %v606
        %v630 = vunpack.c.l.b16 %v607
        %v631 = vunpack.c.l.b16 %v608
        %v632 = vunpack.c.l.b16 %v609
        %v633 = vunpack.c.l.b16 %v610
        %v634 = vunpack.c.l.b16 %v611
        %v635 = vpack.c.b16 %v628, %v627
        %v636 = vpack.c.b16 %v630, %v629
        %v637 = vpack.c.b16 %v632, %v631
        %v638 = vpack.c.b16 %v634, %v633
        %vm643 = vcmask 523264
        %v645 = vsel %vm643, %v600, 0
        %v648 = vsel %vm643, %v601, 0
        %v651 = vsel %vm643, %v602, 0
        %v654 = vsel %vm643, %v603, 0
        %656 = vmatprep.subr.bf16.mxu0 0
        %657 = vmatpush1.bf16.msra.mxu0 0
        %658 = vmatprep.subr.bf16.mxu0 0
        %659 = vmatpush1.bf16.msra.mxu0 0
        %660 = vmatprep.subr.bf16.mxu0 0
        %661 = vmatpush1.bf16.msra.mxu0 0
        %662 = vmatprep.subr.bf16.mxu0 0
        %663 = vmatpush1.bf16.msra.mxu0 0
        %664 = vmatprep.subr.bf16.mxu0 0
        %665 = vmatpush1.bf16.msra.mxu0 %v638
        %666 = vmatprep.subr.bf16.mxu0 0
        %667 = vmatpush1.bf16.msra.mxu0 %v637
        %668 = vmatprep.subr.bf16.mxu0 0
        %669 = vmatpush1.bf16.msra.mxu0 %v636
        %670 = vmatprep.subr.bf16.mxu0 0
        %671 = vmatpush1.bf16.msra.mxu0 %v635
        %672 = vmatprep.subr.bf16.mxu0 0
        %673 = vmatpush2.bf16.msra.mxu0 0
        %674 = vmatprep.subr.bf16.mxu0 0
        %675 = vmatpush2.bf16.msra.mxu0 0
        %676 = vmatprep.subr.bf16.mxu0 0
        %677 = vmatpush2.bf16.msra.mxu0 0
        %678 = vmatprep.subr.bf16.mxu0 0
        %679 = vmatpush2.bf16.msra.mxu0 0
        %680 = vmatprep.subr.bf16.mxu0 0
        %681 = vmatpush2.bf16.msra.mxu0 0
        %682 = vmatprep.subr.bf16.mxu0 0
        %683 = vmatpush2.bf16.msra.mxu0 0
        %684 = vmatprep.subr.bf16.mxu0 0
        %685 = vmatpush2.bf16.msra.mxu0 0
        %686 = vmatprep.subr.bf16.mxu0 0
        %687 = vmatpush2.bf16.msra.mxu0 0
        %688 = vmatprep.mubr.bf16.mxu0 0
        %689 = vmatmul.mubr.bf16.gmra.mxu0 %v645
        %v690 = vpop.f32.mrf.mxu0
        %v691 = vadd.f32 %v617, %v690
        %v692 = vpop.f32.mrf.mxu0
        %v693 = vpop.f32.mrf.mxu0
        %v694 = vadd.f32 %v617, %v693
        %v695 = vpop.f32.mrf.mxu0
        %696 = vmatprep.mubr.bf16.mxu0 0
        %697 = vmatmul.mubr.bf16.gmra.mxu0 %v648
        %v698 = vpop.f32.mrf.mxu0
        %v699 = vadd.f32 %v617, %v698
        %v700 = vpop.f32.mrf.mxu0
        %v701 = vpop.f32.mrf.mxu0
        %v702 = vadd.f32 %v617, %v701
        %v703 = vpop.f32.mrf.mxu0
        %704 = vmatprep.mubr.bf16.mxu0 0
        %705 = vmatmul.mubr.bf16.gmra.mxu0 %v651
        %v706 = vpop.f32.mrf.mxu0
        %v707 = vadd.f32 %v617, %v706
        %v708 = vpop.f32.mrf.mxu0
        %v709 = vpop.f32.mrf.mxu0
        %v710 = vadd.f32 %v617, %v709
        %v711 = vpop.f32.mrf.mxu0
        %712 = vmatprep.mubr.bf16.mxu0 0
        %713 = vmatmul.mubr.bf16.gmra.mxu0 %v654
        %v714 = vpop.f32.mrf.mxu0
        %v715 = vadd.f32 %v617, %v714
        %v716 = vpop.f32.mrf.mxu0
        %v717 = vpop.f32.mrf.mxu0
        %v718 = vadd.f32 %v617, %v717
        %v719 = vpop.f32.mrf.mxu0
        %720 = vdwg.mxu0
        %v721 = vpack.c.bf16 %v694, %v691
        %v722 = vpack.c.bf16 %v702, %v699
        %v723 = vpack.c.bf16 %v710, %v707
        %v724 = vpack.c.bf16 %v718, %v715
        %v725 = vld [vmem:[%s7] sm:$0xf]
        %v726 = vld [vmem:[%s7 + $0x4] sm:$0xf]
        %v727 = vld [vmem:[%s7 + $0x8] sm:$0xf]
        %v728 = vld [vmem:[%s7 + $0xc] sm:$0xf]
        %v729 = vld [vmem:[%s7 + $0x10] sm:$0xf]
        %v730 = vld [vmem:[%s7 + $0x14] sm:$0xf]
        %v731 = vld [vmem:[%s7 + $0x18] sm:$0xf]
        %v732 = vld [vmem:[%s7 + $0x1c] sm:$0xf]
        %v733 = vld [vmem:[%s8] sm:$0xff]
        %v734 = vld [vmem:[%s8 + $0x8] sm:$0xff]
        %v735 = vld [vmem:[%s8 + $0x10] sm:$0xff]
        %v736 = vld [vmem:[%s8 + $0x18] sm:$0xff]
        %v737 = vld [vmem:[%s8 + $0x20] sm:$0xff]
        %v738 = vld [vmem:[%s8 + $0x28] sm:$0xff]
        %v739 = vld [vmem:[%s8 + $0x30] sm:$0xff]
        %v740 = vld [vmem:[%s8 + $0x38] sm:$0xff]
        %742 = vset.pattern.permute.xlu0 0
        %743 = vperm.xlu0 %742, %v733
        %v744 = vpop.permute.xlu0 %743
        %747 = vset.pattern.permute.xlu0 0
        %748 = vperm.xlu0 %747, %v734
        %v749 = vpop.permute.xlu0 %748
        %752 = vset.pattern.permute.xlu0 0
        %753 = vperm.xlu0 %752, %v735
        %v754 = vpop.permute.xlu0 %753
        %757 = vset.pattern.permute.xlu0 0
        %758 = vperm.xlu0 %757, %v736
        %v759 = vpop.permute.xlu0 %758
        %762 = vset.pattern.permute.xlu0 0
        %763 = vperm.xlu0 %762, %v737
        %v764 = vpop.permute.xlu0 %763
        %767 = vset.pattern.permute.xlu0 0
        %768 = vperm.xlu0 %767, %v738
        %v769 = vpop.permute.xlu0 %768
        %772 = vset.pattern.permute.xlu0 0
        %773 = vperm.xlu0 %772, %v739
        %v774 = vpop.permute.xlu0 %773
        %777 = vset.pattern.permute.xlu0 0
        %778 = vperm.xlu0 %777, %v740
        %v779 = vpop.permute.xlu0 %778
        %v789 = vunpack.c.l.b16 %v725
        %v790 = vunpack.c.l.b16 %v726
        %v791 = vunpack.c.l.b16 %v727
        %v792 = vunpack.c.l.b16 %v728
        %v793 = vunpack.c.l.b16 %v729
        %v794 = vunpack.c.l.b16 %v730
        %v795 = vunpack.c.l.b16 %v731
        %v796 = vunpack.c.l.b16 %v732
        %v797 = vpack.c.b16 %v790, %v789
        %v798 = vpack.c.b16 %v792, %v791
        %v799 = vpack.c.b16 %v794, %v793
        %v800 = vpack.c.b16 %v796, %v795
        %v802 = vsel %vm643, %v797, 0
        %v805 = vsel %vm643, %v798, 0
        %v808 = vsel %vm643, %v799, 0
        %v811 = vsel %vm643, %v800, 0
        %813 = vmatprep.subr.bf16.mxu0 0
        %814 = vmatpush1.bf16.msra.mxu0 0
        %815 = vmatprep.subr.bf16.mxu0 0
        %816 = vmatpush1.bf16.msra.mxu0 0
        %817 = vmatprep.subr.bf16.mxu0 0
        %818 = vmatpush1.bf16.msra.mxu0 0
        %819 = vmatprep.subr.bf16.mxu0 0
        %820 = vmatpush1.bf16.msra.mxu0 0
        %821 = vmatprep.subr.bf16.mxu0 0
        %822 = vmatpush1.bf16.msra.mxu0 %v343
        %823 = vmatprep.subr.bf16.mxu0 0
        %824 = vmatpush1.bf16.msra.mxu0 %v342
        %825 = vmatprep.subr.bf16.mxu0 0
        %826 = vmatpush1.bf16.msra.mxu0 %v341
        %827 = vmatprep.subr.bf16.mxu0 0
        %828 = vmatpush1.bf16.msra.mxu0 %v340
        %829 = vmatprep.subr.bf16.mxu0 0
        %830 = vmatpush2.bf16.msra.mxu0 0
        %831 = vmatprep.subr.bf16.mxu0 0
        %832 = vmatpush2.bf16.msra.mxu0 0
        %833 = vmatprep.subr.bf16.mxu0 0
        %834 = vmatpush2.bf16.msra.mxu0 0
        %835 = vmatprep.subr.bf16.mxu0 0
        %836 = vmatpush2.bf16.msra.mxu0 0
        %837 = vmatprep.subr.bf16.mxu0 0
        %838 = vmatpush2.bf16.msra.mxu0 0
        %839 = vmatprep.subr.bf16.mxu0 0
        %840 = vmatpush2.bf16.msra.mxu0 0
        %841 = vmatprep.subr.bf16.mxu0 0
        %842 = vmatpush2.bf16.msra.mxu0 0
        %843 = vmatprep.subr.bf16.mxu0 0
        %844 = vmatpush2.bf16.msra.mxu0 0
        %845 = vmatprep.mubr.bf16.mxu0 0
        %846 = vmatmul.mubr.bf16.gmra.mxu0 %v802
        %v847 = vpop.f32.mrf.mxu0
        %v848 = vadd.f32 %v744, %v847
        %v849 = vpop.f32.mrf.mxu0
        %v850 = vpop.f32.mrf.mxu0
        %v851 = vadd.f32 %v749, %v850
        %v852 = vpop.f32.mrf.mxu0
        %853 = vmatprep.mubr.bf16.mxu0 0
        %854 = vmatmul.mubr.bf16.gmra.mxu0 %v805
        %v855 = vpop.f32.mrf.mxu0
        %v856 = vadd.f32 %v754, %v855
        %v857 = vpop.f32.mrf.mxu0
        %v858 = vpop.f32.mrf.mxu0
        %v859 = vadd.f32 %v759, %v858
        %v860 = vpop.f32.mrf.mxu0
        %861 = vmatprep.mubr.bf16.mxu0 0
        %862 = vmatmul.mubr.bf16.gmra.mxu0 %v808
        %v863 = vpop.f32.mrf.mxu0
        %v864 = vadd.f32 %v764, %v863
        %v865 = vpop.f32.mrf.mxu0
        %v866 = vpop.f32.mrf.mxu0
        %v867 = vadd.f32 %v769, %v866
        %v868 = vpop.f32.mrf.mxu0
        %869 = vmatprep.mubr.bf16.mxu0 0
        %870 = vmatmul.mubr.bf16.gmra.mxu0 %v811
        %v871 = vpop.f32.mrf.mxu0
        %v872 = vadd.f32 %v774, %v871
        %v873 = vpop.f32.mrf.mxu0
        %v874 = vpop.f32.mrf.mxu0
        %v875 = vadd.f32 %v779, %v874
        %v876 = vpop.f32.mrf.mxu0
        %877 = vdwg.mxu0
        %v878 = vmax.f32 %v848, 0.0
        %v879 = vmax.f32 %v851, 0.0
        %v880 = vmax.f32 %v856, 0.0
        %v881 = vmax.f32 %v859, 0.0
        %v882 = vmax.f32 %v864, 0.0
        %v883 = vmax.f32 %v867, 0.0
        %v884 = vmax.f32 %v872, 0.0
        %v885 = vmax.f32 %v875, 0.0
        %v886 = vpack.c.bf16 %v879, %v878
        %v887 = vpack.c.bf16 %v881, %v880
        %v888 = vpack.c.bf16 %v883, %v882
        %v889 = vpack.c.bf16 %v885, %v884
        %890 = vxpose.xlu0.c.b16.start [1/8] %v886, 128
        %891 = vxpose.xlu0.c.b16.cont [2/8] %v887, 128
        %892 = vxpose.xlu0.c.b16.cont [3/8] %v888, 128
        %893 = vxpose.xlu0.c.b16.cont [4/8] %v889, 128
        %894 = vxpose.xlu0.c.b16.cont [5/8] 0, 128
        %895 = vxpose.xlu0.c.b16.cont [6/8] 0, 128
        %896 = vxpose.xlu0.c.b16.cont [7/8] 0, 128
        %897 = vxpose.xlu0.c.b16.end [8/8] 0, 128
        %v898 = vpop.trf.xlu0
        %v899 = vpop.trf.xlu0
        %v900 = vpop.trf.xlu0
        %v901 = vpop.trf.xlu0
        %v902 = vpop.trf.xlu0
        %v903 = vpop.trf.xlu0
        %v904 = vpop.trf.xlu0
        %v905 = vpop.trf.xlu0
        %v907 = vsel %vm643, %v898, 0
        %v910 = vsel %vm643, %v899, 0
        %v913 = vsel %vm643, %v900, 0
        %v916 = vsel %vm643, %v901, 0
        %v919 = vsel %vm643, %v902, 0
        %v922 = vsel %vm643, %v903, 0
        %v925 = vsel %vm643, %v904, 0
        %v928 = vsel %vm643, %v905, 0
        %930 = vmatprep.subr.bf16.mxu0 0
        %931 = vmatpush1.bf16.msra.mxu0 0
        %932 = vmatprep.subr.bf16.mxu0 0
        %933 = vmatpush1.bf16.msra.mxu0 0
        %934 = vmatprep.subr.bf16.mxu0 0
        %935 = vmatpush1.bf16.msra.mxu0 0
        %936 = vmatprep.subr.bf16.mxu0 0
        %937 = vmatpush1.bf16.msra.mxu0 0
        %938 = vmatprep.subr.bf16.mxu0 0
        %939 = vmatpush1.bf16.msra.mxu0 %v724
        %940 = vmatprep.subr.bf16.mxu0 0
        %941 = vmatpush1.bf16.msra.mxu0 %v723
        %942 = vmatprep.subr.bf16.mxu0 0
        %943 = vmatpush1.bf16.msra.mxu0 %v722
        %944 = vmatprep.subr.bf16.mxu0 0
        %945 = vmatpush1.bf16.msra.mxu0 %v721
        %946 = vmatprep.subr.bf16.mxu0 0
        %947 = vmatpush2.bf16.msra.mxu0 0
        %948 = vmatprep.subr.bf16.mxu0 0
        %949 = vmatpush2.bf16.msra.mxu0 0
        %950 = vmatprep.subr.bf16.mxu0 0
        %951 = vmatpush2.bf16.msra.mxu0 0
        %952 = vmatprep.subr.bf16.mxu0 0
        %953 = vmatpush2.bf16.msra.mxu0 0
        %954 = vmatprep.subr.bf16.mxu0 0
        %955 = vmatpush2.bf16.msra.mxu0 0
        %956 = vmatprep.subr.bf16.mxu0 0
        %957 = vmatpush2.bf16.msra.mxu0 0
        %958 = vmatprep.subr.bf16.mxu0 0
        %959 = vmatpush2.bf16.msra.mxu0 0
        %960 = vmatprep.subr.bf16.mxu0 0
        %961 = vmatpush2.bf16.msra.mxu0 0
        %962 = vmatprep.mubr.bf16.mxu0 0
        %963 = vmatmul.mubr.bf16.gmra.mxu0 %v907
        %v964 = vpop.f32.mrf.mxu0
        %v965 = vadd.f32 0.0, %v964
        %v966 = vpop.f32.mrf.mxu0
        %v967 = vpop.f32.mrf.mxu0
        %v968 = vadd.f32 0.0, %v967
        %v969 = vpop.f32.mrf.mxu0
        %970 = vmatprep.mubr.bf16.mxu0 0
        %971 = vmatmul.mubr.bf16.gmra.mxu0 %v910
        %v972 = vpop.f32.mrf.mxu0
        %v973 = vadd.f32 0.0, %v972
        %v974 = vpop.f32.mrf.mxu0
        %v975 = vpop.f32.mrf.mxu0
        %v976 = vadd.f32 0.0, %v975
        %v977 = vpop.f32.mrf.mxu0
        %978 = vmatprep.mubr.bf16.mxu0 0
        %979 = vmatmul.mubr.bf16.gmra.mxu0 %v913
        %v980 = vpop.f32.mrf.mxu0
        %v981 = vadd.f32 0.0, %v980
        %v982 = vpop.f32.mrf.mxu0
        %v983 = vpop.f32.mrf.mxu0
        %v984 = vadd.f32 0.0, %v983
        %v985 = vpop.f32.mrf.mxu0
        %986 = vmatprep.mubr.bf16.mxu0 0
        %987 = vmatmul.mubr.bf16.gmra.mxu0 %v916
        %v988 = vpop.f32.mrf.mxu0
        %v989 = vadd.f32 0.0, %v988
        %v990 = vpop.f32.mrf.mxu0
        %v991 = vpop.f32.mrf.mxu0
        %v992 = vadd.f32 0.0, %v991
        %v993 = vpop.f32.mrf.mxu0
        %994 = vmatprep.mubr.bf16.mxu0 0
        %995 = vmatmul.mubr.bf16.gmra.mxu0 %v919
        %v996 = vpop.f32.mrf.mxu0
        %v997 = vadd.f32 0.0, %v996
        %v998 = vpop.f32.mrf.mxu0
        %v999 = vpop.f32.mrf.mxu0
        %v1000 = vadd.f32 0.0, %v999
        %v1001 = vpop.f32.mrf.mxu0
        %1002 = vmatprep.mubr.bf16.mxu0 0
        %1003 = vmatmul.mubr.bf16.gmra.mxu0 %v922
        %v1004 = vpop.f32.mrf.mxu0
        %v1005 = vadd.f32 0.0, %v1004
        %v1006 = vpop.f32.mrf.mxu0
        %v1007 = vpop.f32.mrf.mxu0
        %v1008 = vadd.f32 0.0, %v1007
        %v1009 = vpop.f32.mrf.mxu0
        %1010 = vmatprep.mubr.bf16.mxu0 0
        %1011 = vmatmul.mubr.bf16.gmra.mxu0 %v925
        %v1012 = vpop.f32.mrf.mxu0
        %v1013 = vadd.f32 0.0, %v1012
        %v1014 = vpop.f32.mrf.mxu0
        %v1015 = vpop.f32.mrf.mxu0
        %v1016 = vadd.f32 0.0, %v1015
        %v1017 = vpop.f32.mrf.mxu0
        %1018 = vmatprep.mubr.bf16.mxu0 0
        %1019 = vmatmul.mubr.bf16.gmra.mxu0 %v928
        %v1020 = vpop.f32.mrf.mxu0
        %v1021 = vadd.f32 0.0, %v1020
        %v1022 = vpop.f32.mrf.mxu0
        %v1023 = vpop.f32.mrf.mxu0
        %v1024 = vadd.f32 0.0, %v1023
        %v1025 = vpop.f32.mrf.mxu0
        %1026 = vdwg.mxu0
        %1027 = vmax.xlane.f32.xlu0 %v965
        %v1028 = vpop.xlane.xlu0 %1027
        %1029 = vmax.xlane.f32.xlu0 %v968
        %v1030 = vpop.xlane.xlu0 %1029
        %1031 = vmax.xlane.f32.xlu0 %v973
        %v1032 = vpop.xlane.xlu0 %1031
        %1033 = vmax.xlane.f32.xlu0 %v976
        %v1034 = vpop.xlane.xlu0 %1033
        %1035 = vmax.xlane.f32.xlu0 %v981
        %v1036 = vpop.xlane.xlu0 %1035
        %1037 = vmax.xlane.f32.xlu0 %v984
        %v1038 = vpop.xlane.xlu0 %1037
        %1039 = vmax.xlane.f32.xlu0 %v989
        %v1040 = vpop.xlane.xlu0 %1039
        %1041 = vmax.xlane.f32.xlu0 %v992
        %v1042 = vpop.xlane.xlu0 %1041
        %1043 = vmax.xlane.f32.xlu0 %v997
        %v1044 = vpop.xlane.xlu0 %1043
        %1045 = vmax.xlane.f32.xlu0 %v1000
        %v1046 = vpop.xlane.xlu0 %1045
        %1047 = vmax.xlane.f32.xlu0 %v1005
        %v1048 = vpop.xlane.xlu0 %1047
        %1049 = vmax.xlane.f32.xlu0 %v1008
        %v1050 = vpop.xlane.xlu0 %1049
        %1051 = vmax.xlane.f32.xlu0 %v1013
        %v1052 = vpop.xlane.xlu0 %1051
        %1053 = vmax.xlane.f32.xlu0 %v1016
        %v1054 = vpop.xlane.xlu0 %1053
        %1055 = vmax.xlane.f32.xlu0 %v1021
        %v1056 = vpop.xlane.xlu0 %1055
        %1057 = vmax.xlane.f32.xlu0 %v1024
        %v1058 = vpop.xlane.xlu0 %1057
        %v1059 = vsub.f32 %v965, %v1028
        %v1060 = vsub.f32 %v968, %v1030
        %v1061 = vsub.f32 %v973, %v1032
        %v1062 = vsub.f32 %v976, %v1034
        %v1063 = vsub.f32 %v981, %v1036
        %v1064 = vsub.f32 %v984, %v1038
        %v1065 = vsub.f32 %v989, %v1040
        %v1066 = vsub.f32 %v992, %v1042
        %v1067 = vsub.f32 %v997, %v1044
        %v1068 = vsub.f32 %v1000, %v1046
        %v1069 = vsub.f32 %v1005, %v1048
        %v1070 = vsub.f32 %v1008, %v1050
        %v1071 = vsub.f32 %v1013, %v1052
        %v1072 = vsub.f32 %v1016, %v1054
        %v1073 = vsub.f32 %v1021, %v1056
        %v1074 = vsub.f32 %v1024, %v1058
        %v1075 = vmul.f32 %v1059, 1.442695
        %v1076 = vpow.pop %v1075
        %v1077 = vmul.f32 %v1060, 1.442695
        %v1078 = vpow.pop %v1077
        %v1079 = vmul.f32 %v1061, 1.442695
        %v1080 = vpow.pop %v1079
        %v1081 = vmul.f32 %v1062, 1.442695
        %v1082 = vpow.pop %v1081
        %v1083 = vmul.f32 %v1063, 1.442695
        %v1084 = vpow.pop %v1083
        %v1085 = vmul.f32 %v1064, 1.442695
        %v1086 = vpow.pop %v1085
        %v1087 = vmul.f32 %v1065, 1.442695
        %v1088 = vpow.pop %v1087
        %v1089 = vmul.f32 %v1066, 1.442695
        %v1090 = vpow.pop %v1089
        %v1091 = vmul.f32 %v1067, 1.442695
        %v1092 = vpow.pop %v1091
        %v1093 = vmul.f32 %v1068, 1.442695
        %v1094 = vpow.pop %v1093
        %v1095 = vmul.f32 %v1069, 1.442695
        %v1096 = vpow.pop %v1095
        %v1097 = vmul.f32 %v1070, 1.442695
        %v1098 = vpow.pop %v1097
        %v1099 = vmul.f32 %v1071, 1.442695
        %v1100 = vpow.pop %v1099
        %v1101 = vmul.f32 %v1072, 1.442695
        %v1102 = vpow.pop %v1101
        %v1103 = vmul.f32 %v1073, 1.442695
        %v1104 = vpow.pop %v1103
        %v1105 = vmul.f32 %v1074, 1.442695
        %v1106 = vpow.pop %v1105
        %1107 = vadd.xlane.f32.xlu0 %v1076
        %v1108 = vpop.xlane.xlu0 %1107
        %1109 = vadd.xlane.f32.xlu0 %v1078
        %v1110 = vpop.xlane.xlu0 %1109
        %1111 = vadd.xlane.f32.xlu0 %v1080
        %v1112 = vpop.xlane.xlu0 %1111
        %1113 = vadd.xlane.f32.xlu0 %v1082
        %v1114 = vpop.xlane.xlu0 %1113
        %1115 = vadd.xlane.f32.xlu0 %v1084
        %v1116 = vpop.xlane.xlu0 %1115
        %1117 = vadd.xlane.f32.xlu0 %v1086
        %v1118 = vpop.xlane.xlu0 %1117
        %1119 = vadd.xlane.f32.xlu0 %v1088
        %v1120 = vpop.xlane.xlu0 %1119
        %1121 = vadd.xlane.f32.xlu0 %v1090
        %v1122 = vpop.xlane.xlu0 %1121
        %1123 = vadd.xlane.f32.xlu0 %v1092
        %v1124 = vpop.xlane.xlu0 %1123
        %1125 = vadd.xlane.f32.xlu0 %v1094
        %v1126 = vpop.xlane.xlu0 %1125
        %1127 = vadd.xlane.f32.xlu0 %v1096
        %v1128 = vpop.xlane.xlu0 %1127
        %1129 = vadd.xlane.f32.xlu0 %v1098
        %v1130 = vpop.xlane.xlu0 %1129
        %1131 = vadd.xlane.f32.xlu0 %v1100
        %v1132 = vpop.xlane.xlu0 %1131
        %1133 = vadd.xlane.f32.xlu0 %v1102
        %v1134 = vpop.xlane.xlu0 %1133
        %1135 = vadd.xlane.f32.xlu0 %v1104
        %v1136 = vpop.xlane.xlu0 %1135
        %1137 = vadd.xlane.f32.xlu0 %v1106
        %v1138 = vpop.xlane.xlu0 %1137
        %v1139 = vrcp.pop %v1108
        %v1140 = vrcp.pop %v1110
        %v1141 = vrcp.pop %v1112
        %v1142 = vrcp.pop %v1114
        %v1143 = vrcp.pop %v1116
        %v1144 = vrcp.pop %v1118
        %v1145 = vrcp.pop %v1120
        %v1146 = vrcp.pop %v1122
        %v1147 = vrcp.pop %v1124
        %v1148 = vrcp.pop %v1126
        %v1149 = vrcp.pop %v1128
        %v1150 = vrcp.pop %v1130
        %v1151 = vrcp.pop %v1132
        %v1152 = vrcp.pop %v1134
        %v1153 = vrcp.pop %v1136
        %v1154 = vrcp.pop %v1138
        %v1155 = vmul.f32 %v1076, %v1139
        %v1156 = vmul.f32 %v1078, %v1140
        %v1157 = vmul.f32 %v1080, %v1141
        %v1158 = vmul.f32 %v1082, %v1142
        %v1159 = vmul.f32 %v1084, %v1143
        %v1160 = vmul.f32 %v1086, %v1144
        %v1161 = vmul.f32 %v1088, %v1145
        %v1162 = vmul.f32 %v1090, %v1146
        %v1163 = vmul.f32 %v1092, %v1147
        %v1164 = vmul.f32 %v1094, %v1148
        %v1165 = vmul.f32 %v1096, %v1149
        %v1166 = vmul.f32 %v1098, %v1150
        %v1167 = vmul.f32 %v1100, %v1151
        %v1168 = vmul.f32 %v1102, %v1152
        %v1169 = vmul.f32 %v1104, %v1153
        %v1170 = vmul.f32 %v1106, %v1154
        %v1171 = vpack.c.bf16 %v1156, %v1155
        %v1172 = vpack.c.bf16 %v1158, %v1157
        %v1173 = vpack.c.bf16 %v1160, %v1159
        %v1174 = vpack.c.bf16 %v1162, %v1161
        %v1175 = vpack.c.bf16 %v1164, %v1163
        %v1176 = vpack.c.bf16 %v1166, %v1165
        %v1177 = vpack.c.bf16 %v1168, %v1167
        %v1178 = vpack.c.bf16 %v1170, %v1169
        %1179 = vmatprep.subr.bf16.mxu0 0
        %1180 = vmatpush1.bf16.msra.mxu0 %v1178
        %1181 = vmatprep.subr.bf16.mxu0 0
        %1182 = vmatpush1.bf16.msra.mxu0 %v1177
        %1183 = vmatprep.subr.bf16.mxu0 0
        %1184 = vmatpush1.bf16.msra.mxu0 %v1176
        %1185 = vmatprep.subr.bf16.mxu0 0
        %1186 = vmatpush1.bf16.msra.mxu0 %v1175
        %1187 = vmatprep.subr.bf16.mxu0 0
        %1188 = vmatpush1.bf16.msra.mxu0 %v1174
        %1189 = vmatprep.subr.bf16.mxu0 0
        %1190 = vmatpush1.bf16.msra.mxu0 %v1173
        %1191 = vmatprep.subr.bf16.mxu0 0
        %1192 = vmatpush1.bf16.msra.mxu0 %v1172
        %1193 = vmatprep.subr.bf16.mxu0 0
        %1194 = vmatpush1.bf16.msra.mxu0 %v1171
        %1195 = vmatprep.subr.bf16.mxu0 0
        %1196 = vmatpush2.bf16.msra.mxu0 0
        %1197 = vmatprep.subr.bf16.mxu0 0
        %1198 = vmatpush2.bf16.msra.mxu0 0
        %1199 = vmatprep.subr.bf16.mxu0 0
        %1200 = vmatpush2.bf16.msra.mxu0 0
        %1201 = vmatprep.subr.bf16.mxu0 0
        %1202 = vmatpush2.bf16.msra.mxu0 0
        %1203 = vmatprep.subr.bf16.mxu0 0
        %1204 = vmatpush2.bf16.msra.mxu0 0
        %1205 = vmatprep.subr.bf16.mxu0 0
        %1206 = vmatpush2.bf16.msra.mxu0 0
        %1207 = vmatprep.subr.bf16.mxu0 0
        %1208 = vmatpush2.bf16.msra.mxu0 0
        %1209 = vmatprep.subr.bf16.mxu0 0
        %1210 = vmatpush2.bf16.msra.mxu0 0
        %1211 = vmatprep.mubr.bf16.mxu0 0
        %1212 = vmatmul.mubr.bf16.gmra.mxu0 %v340
        %v1213 = vpop.f32.mrf.mxu0
        %v1214 = vadd.f32 0.0, %v1213
        %v1215 = vpop.f32.mrf.mxu0
        %v1216 = vpop.f32.mrf.mxu0
        %v1217 = vadd.f32 0.0, %v1216
        %v1218 = vpop.f32.mrf.mxu0
        %1219 = vmatprep.mubr.bf16.mxu0 0
        %1220 = vmatmul.mubr.bf16.gmra.mxu0 %v341
        %v1221 = vpop.f32.mrf.mxu0
        %v1222 = vadd.f32 0.0, %v1221
        %v1223 = vpop.f32.mrf.mxu0
        %v1224 = vpop.f32.mrf.mxu0
        %v1225 = vadd.f32 0.0, %v1224
        %v1226 = vpop.f32.mrf.mxu0
        %1227 = vmatprep.mubr.bf16.mxu0 0
        %1228 = vmatmul.mubr.bf16.gmra.mxu0 %v342
        %v1229 = vpop.f32.mrf.mxu0
        %v1230 = vadd.f32 0.0, %v1229
        %v1231 = vpop.f32.mrf.mxu0
        %v1232 = vpop.f32.mrf.mxu0
        %v1233 = vadd.f32 0.0, %v1232
        %v1234 = vpop.f32.mrf.mxu0
        %1235 = vmatprep.mubr.bf16.mxu0 0
        %1236 = vmatmul.mubr.bf16.gmra.mxu0 %v343
        %v1237 = vpop.f32.mrf.mxu0
        %v1238 = vadd.f32 0.0, %v1237
        %v1239 = vpop.f32.mrf.mxu0
        %v1240 = vpop.f32.mrf.mxu0
        %v1241 = vadd.f32 0.0, %v1240
        %v1242 = vpop.f32.mrf.mxu0
        %1243 = vdwg.mxu0
        %1244 = vst [vmem:[%s325] sm:$0xff] %v1214
        %1245 = vst [vmem:[%s325 + $0x8] sm:$0xff] %v1217
        %1246 = vst [vmem:[%s325 + $0x10] sm:$0xff] %v1222
        %1247 = vst [vmem:[%s325 + $0x18] sm:$0xff] %v1225
        %1248 = vst [vmem:[%s325 + $0x20] sm:$0xff] %v1230
        %1249 = vst [vmem:[%s325 + $0x28] sm:$0xff] %v1233
        %1250 = vst [vmem:[%s325 + $0x30] sm:$0xff] %v1238
        %1251 = vst [vmem:[%s325 + $0x38] sm:$0xff] %v1241
        %s1252 = sand.u32 %s225, 1
        %s1253 = scalar_lea.sflag [#allocation3], %s1252
        %s1254 = sand.u32 %s225, 1
        %s1255 = smul.addr %s1254, 64
        %s1256 = scalar_lea.vmem [#allocation2], %s1255
        // Predicated region
        $region57: #{tpu_custom_call.1} parent=55 // pred_check
          %p1257 = pneg %p235
        $region58: #{tpu_custom_call.1} parent=55 // pred_check_branch
          %1259 = sbr.rel (%p1257) target = $region60
        $region59: #{tpu_custom_call.1} parent=55 // pred_region
          %s1261 = ssub.s32 1024, 1024
          %1262 = vsyncadd %s1253, %s1261
          %s1263 = smul.addr %s23, 8
          %s1264 = smul.addr %s1263, 128
          %s1265 = scalar_lea.hbm %s9, %s1264
          %s1266 = sshll.u32 %s1256, 4
          %s1267 = int_to_ptr.vmem [resolvable:$true] %s1266
          %1272 = dma.vmem_to_hbm [thread:$0]  %s1267, 1024, %s1265, %s1253, 128, 128, 8
        $region60: #{tpu_custom_call.1} parent=55 // pred_fallthru
          _
      $region56: #{tpu_custom_call.1} parent=5 // pred_fallthru
        _
      %p1273 = scmp.le.s32.totalorder 2, %s18
      // Predicated region
      $region61: #{tpu_custom_call.1} parent=5 // pred_check
        %p1274 = pneg %p1273
      $region62: #{tpu_custom_call.1} parent=5 // pred_check_branch
        %1276 = sbr.rel (%p1274) target = $region64
      $region63: #{tpu_custom_call.1} parent=5 // pred_region
        %s1277 = ssub.s32 %s18, 2
        // Predicated region
        $region65: #{tpu_custom_call.1} parent=63 // pred_check
          %p1278 = pneg %p241
        $region66: #{tpu_custom_call.1} parent=63 // pred_check_branch
          %1280 = sbr.rel (%p1278) target = $region68
        $region67: #{tpu_custom_call.1} parent=63 // pred_region
          %s1281 = sand.u32 %s226, 1
          %s1282 = scalar_lea.sflag [#allocation3], %s1281
          %s1283 = sand.u32 %s226, 1
          %s1284 = smul.addr %s1283, 64
          %s1285 = scalar_lea.vmem [#allocation2], %s1284
          %1286 = dma.done %s1282, 1024
        $region68: #{tpu_custom_call.1} parent=63 // pred_fallthru
          _
      $region64: #{tpu_custom_call.1} parent=5 // pred_fallthru
        _
    $region6: #{tpu_custom_call.1} parent=1 // loop_footer
      %s22 = sadd.s32 1, %s18
    $region7: #{tpu_custom_call.1} parent=1 // loop_footer_branch
      %17 = sbr.rel target = $region3
    $region8: #{tpu_custom_call.1} parent=1 // loop_exit
      _
    %1287 = vsyncpa [#allocation3], 1
    %s1288 = scalar_lea.sflag [#allocation3], 1
    %1289 = vsyncpa %s1288, 1

</llo_original>
